<compile_context>
chip_gen: v6e
topology: v6e:2x2x1
jax: 0.10.0
libtpu: 0.0.40
codegen_flags: <defaults>
</compile_context>

<pallas_src>
import functools

import jax
import jax.numpy as jnp
from jax.experimental import pallas as pl
from jax.experimental.pallas import tpu as pltpu


def _round_up(x, m):
    return ((x + m - 1) // m) * m


def _mlp_kernel(x_ref, w1_ref, b1_ref, w2_ref, b2_ref, w3_ref, b3_ref,
                w7_ref, b7_ref, o_ref):
    """One batch tile. Transposed layout: activations are (hidden, block_b)."""
    cd = w2_ref.dtype                       # compute dtype (x/weights pre-cast)

    x = x_ref[...]                          # (F_pad, Bt), already compute dtype

    # fc1 + bias + ReLU (+cast) : (H, F_pad) @ (F_pad, Bt) -> (H, Bt), f32 acc.
    h = jnp.dot(w1_ref[...], x, preferred_element_type=jnp.float32)
    h = jnp.maximum(h + b1_ref[...], 0.0).astype(cd)

    # fc2 + bias + ReLU (+cast)
    h = jnp.dot(w2_ref[...], h, preferred_element_type=jnp.float32)
    h = jnp.maximum(h + b2_ref[...], 0.0).astype(cd)

    # fc3 + bias + ReLU (+cast)
    h = jnp.dot(w3_ref[...], h, preferred_element_type=jnp.float32)
    h = jnp.maximum(h + b3_ref[...], 0.0).astype(cd)

    # fc7 (out_features = 1): VPU multiply + sublane (XLU) reduce instead of a
    # degenerate N=1 MXU matmul.  Result is lane-dense over the batch.
    z = jnp.sum(h * w7_ref[...], axis=0, keepdims=True) + b7_ref[...]  # (1, Bt)
    o_ref[...] = 0.5 * jax.nn.sigmoid(z)


@functools.partial(jax.jit, static_argnames=("block_b", "compute_dtype"))
def heston_net_forward(x, params, *, block_b=1024, compute_dtype=jnp.bfloat16):
    """4-layer Heston MLP forward pass in one Pallas kernel.

    x: (B, num_input) float32
    params: PyTorch-layout weights: w* are (out_features, in_features),
            b* are (out_features,).
    returns: (B, 1) float32.

    block_b guidance: 1024-2048 on v5e/v6e/v7x alike (per-tile VMEM is tiny);
    the wrapper clamps the effective tile so large batches always yield >= 2
    grid steps (keeps both v7x TensorCores busy) and tiny batches aren't
    over-padded.  The bf16 default trades ~1e-2-level absolute error on the
    (0, 0.5) output for speed; pass compute_dtype=jnp.float32 for full f32.
    """
    assert x.ndim == 2
    B, F = x.shape
    H, F_w = params["w1"].shape
    assert F_w == F

    cd = compute_dtype

    # Effective batch tile (static python ints: B is a shape).
    bb = max(128, min(block_b, _round_up((B + 1) // 2, 128)))
    num_blocks = (B + bb - 1) // bb
    B_pad = num_blocks * bb

    # Pad the feature dim to a multiple of 8; zero columns of W1 keep the
    # math exact while cleaning up the x-tile DMA / first-matmul K.
    F_pad = max(8, _round_up(F, 8))
    w1 = params["w1"]
    if F_pad != F:
        w1 = jnp.pad(w1, ((0, 0), (0, F_pad - F)))

    # x stream: convert -> pad -> transpose, kept adjacent so XLA fuses them
    # into one half-width (bf16) relayout pass producing the (F_pad, B_pad)
    # slab the kernel reads.  Padded batch rows are garbage-in and sliced off.
    xc = x.astype(cd)
    if B_pad != B or F_pad != F:
        xc = jnp.pad(xc, ((0, B_pad - B), (0, F_pad - F)))
    xT = xc.T                                                   # (F_pad, B_pad)

    w1c = w1.astype(cd)
    w2c = params["w2"].astype(cd)
    w3c = params["w3"].astype(cd)
    b1 = params["b1"].reshape(H, 1).astype(jnp.float32)
    b2 = params["b2"].reshape(H, 1).astype(jnp.float32)
    b3 = params["b3"].reshape(H, 1).astype(jnp.float32)
    w7 = params["w7"].reshape(H, 1).astype(jnp.float32)         # (1,H) -> column
    b7 = params["b7"].reshape(1, 1).astype(jnp.float32)

    def rep(shape):                    # full-array block, replicated over grid
        return pl.BlockSpec(shape, lambda i: (0, 0))

    out = pl.pallas_call(
        _mlp_kernel,
        out_shape=jax.ShapeDtypeStruct((1, B_pad), jnp.float32),
        grid_spec=pltpu.PrefetchScalarGridSpec(
            num_scalar_prefetch=0,
            grid=(num_blocks,),
            in_specs=[
                pl.BlockSpec((F_pad, bb), lambda i: (0, i)),     # x tile
                rep((H, F_pad)), rep((H, 1)),                    # fc1
                rep((H, H)), rep((H, 1)),                        # fc2
                rep((H, H)), rep((H, 1)),                        # fc3
                rep((H, 1)), rep((1, 1)),                        # fc7
            ],
            out_specs=pl.BlockSpec((1, bb), lambda i: (0, i)),   # lane-dense
        ),
        compiler_params=pltpu.CompilerParams(
            dimension_semantics=("parallel",)),
    )(xT, w1c, b1, w2c, b2, w3c, b3, w7, b7)

    # (1, B_pad) -> (B, 1)
    return out.reshape(B_pad, 1)[:B]


def init_params(key, num_input=7, num_neurons=128):
    """nn.Linear-style init, PyTorch layout: W (out, in), b (out,)."""
    def linear(key, fan_in, fan_out):
        kw, kb = jax.random.split(key)
        bound = 1.0 / jnp.sqrt(fan_in)
        w = jax.random.uniform(kw, (fan_out, fan_in), jnp.float32, -bound, bound)
        b = jax.random.uniform(kb, (fan_out,), jnp.float32, -bound, bound)
        return w, b

    k1, k2, k3, k7 = jax.random.split(key, 4)
    w1, b1 = linear(k1, num_input, num_neurons)
    w2, b2 = linear(k2, num_neurons, num_neurons)
    w3, b3 = linear(k3, num_neurons, num_neurons)
    w7, b7 = linear(k7, num_neurons, 1)
    return dict(w1=w1, b1=b1, w2=w2, b2=b2, w3=w3, b3=b3, w7=w7, b7=b7)


def _reference(x, p):
    h = jnp.maximum(x @ p["w1"].T + p["b1"], 0.0)
    h = jnp.maximum(h @ p["w2"].T + p["b2"], 0.0)
    h = jnp.maximum(h @ p["w3"].T + p["b3"], 0.0)
    return 0.5 * jax.nn.sigmoid(h @ p["w7"].T + p["b7"])


if __name__ == "__main__":
    key = jax.random.PRNGKey(0)
    kx, kx2, kp = jax.random.split(key, 3)

    num_input, num_neurons = 7, 128
    params = init_params(kp, num_input=num_input, num_neurons=num_neurons)

    # Small demo batch (B=8 -> clamped to one 128-wide tile).
    B = 8
    x = jax.random.normal(kx, (B, num_input), jnp.float32)
    ref = _reference(x, params)

    out_bf16 = jax.block_until_ready(heston_net_forward(x, params))
    out_f32 = jax.block_until_ready(
        heston_net_forward(x, params, compute_dtype=jnp.float32))

    assert out_bf16.shape == (B, 1) and out_f32.shape == (B, 1)
    assert jnp.allclose(out_f32, ref, atol=2e-3), "f32 path mismatch"
    assert jnp.allclose(out_bf16, ref, atol=2.5e-2), "bf16 path mismatch"

    # Non-divisible batch; the clamp yields 2 parallel grid steps of 256.
    B2 = 300
    x2 = jax.random.normal(kx2, (B2, num_input), jnp.float32)
    out2 = jax.block_until_ready(heston_net_forward(x2, params))
    assert out2.shape == (B2, 1)
    assert jnp.allclose(out2, _reference(x2, params), atol=2.5e-2)

    print("KERNEL_OK")
</pallas_src>

<mosaic_0001>
module attributes {stable_mosaic.version = 11 : i64} {
  func.func @_mlp_kernel(%arg0: i32, %arg1: memref<8x128xbf16, #tpu.memory_space<vmem>>, %arg2: memref<128x8xbf16, #tpu.memory_space<vmem>>, %arg3: memref<128x1xf32, #tpu.memory_space<vmem>>, %arg4: memref<128x128xbf16, #tpu.memory_space<vmem>>, %arg5: memref<128x1xf32, #tpu.memory_space<vmem>>, %arg6: memref<128x128xbf16, #tpu.memory_space<vmem>>, %arg7: memref<128x1xf32, #tpu.memory_space<vmem>>, %arg8: memref<128x1xf32, #tpu.memory_space<vmem>>, %arg9: memref<1x1xf32, #tpu.memory_space<vmem>>, %arg10: memref<1x128xf32, #tpu.memory_space<vmem>>) attributes {dimension_semantics = [#tpu.dimension_semantics<parallel>], iteration_bounds = array<i64: 1>, scalar_prefetch = 0 : i64, scratch_operands = 0 : i64, tpu.core_type = #tpu.core_type<tc>, window_params = [{transform_indices = @transform_0, window_bounds = array<i64: 8, 128>}, {pipeline_mode = #tpu.pipeline_mode<synchronous>, transform_indices = @transform_1, window_bounds = array<i64: 128, 8>}, {pipeline_mode = #tpu.pipeline_mode<synchronous>, transform_indices = @transform_2, window_bounds = array<i64: 128, 1>}, {pipeline_mode = #tpu.pipeline_mode<synchronous>, transform_indices = @transform_3, window_bounds = array<i64: 128, 128>}, {pipeline_mode = #tpu.pipeline_mode<synchronous>, transform_indices = @transform_4, window_bounds = array<i64: 128, 1>}, {pipeline_mode = #tpu.pipeline_mode<synchronous>, transform_indices = @transform_5, window_bounds = array<i64: 128, 128>}, {pipeline_mode = #tpu.pipeline_mode<synchronous>, transform_indices = @transform_6, window_bounds = array<i64: 128, 1>}, {pipeline_mode = #tpu.pipeline_mode<synchronous>, transform_indices = @transform_7, window_bounds = array<i64: 128, 1>}, {pipeline_mode = #tpu.pipeline_mode<synchronous>, transform_indices = @transform_8, window_bounds = array<i64: 1, 1>}, {transform_indices = @transform_9, window_bounds = array<i64: 1, 128>}]} {
    %c0 = arith.constant 0 : index
    %c0_0 = arith.constant 0 : index
    %0 = vector.load %arg1[%c0, %c0_0] : memref<8x128xbf16, #tpu.memory_space<vmem>>, vector<8x128xbf16>
    %c0_1 = arith.constant 0 : index
    %c0_2 = arith.constant 0 : index
    %1 = vector.load %arg2[%c0_1, %c0_2] : memref<128x8xbf16, #tpu.memory_space<vmem>>, vector<128x8xbf16>
    %cst = arith.constant dense<0.000000e+00> : vector<128x128xf32>
    %2 = tpu.matmul %1, %0, %cst {dimension_numbers = #tpu.dot_dimension_numbers<[1], [0], [0], [1], [0, 0, 1, 1], [], []>} : vector<128x8xbf16>, vector<8x128xbf16>, vector<128x128xf32> -> vector<128x128xf32>
    %c0_3 = arith.constant 0 : index
    %c0_4 = arith.constant 0 : index
    %3 = vector.load %arg3[%c0_3, %c0_4] : memref<128x1xf32, #tpu.memory_space<vmem>>, vector<128x1xf32>
    %4 = vector.broadcast %3 : vector<128x1xf32> to vector<128x128xf32>
    %5 = arith.addf %2, %4 : vector<128x128xf32>
    %cst_5 = arith.constant 0.000000e+00 : f32
    %6 = vector.broadcast %cst_5 : f32 to vector<128x128xf32>
    %7 = arith.maximumf %5, %6 : vector<128x128xf32>
    %8 = arith.truncf %7 : vector<128x128xf32> to vector<128x128xbf16>
    %c0_6 = arith.constant 0 : index
    %c0_7 = arith.constant 0 : index
    %9 = vector.load %arg4[%c0_6, %c0_7] : memref<128x128xbf16, #tpu.memory_space<vmem>>, vector<128x128xbf16>
    %cst_8 = arith.constant dense<0.000000e+00> : vector<128x128xf32>
    %10 = tpu.matmul %9, %8, %cst_8 {dimension_numbers = #tpu.dot_dimension_numbers<[1], [0], [0], [1], [0, 0, 1, 1], [], []>} : vector<128x128xbf16>, vector<128x128xbf16>, vector<128x128xf32> -> vector<128x128xf32>
    %c0_9 = arith.constant 0 : index
    %c0_10 = arith.constant 0 : index
    %11 = vector.load %arg5[%c0_9, %c0_10] : memref<128x1xf32, #tpu.memory_space<vmem>>, vector<128x1xf32>
    %12 = vector.broadcast %11 : vector<128x1xf32> to vector<128x128xf32>
    %13 = arith.addf %10, %12 : vector<128x128xf32>
    %cst_11 = arith.constant 0.000000e+00 : f32
    %14 = vector.broadcast %cst_11 : f32 to vector<128x128xf32>
    %15 = arith.maximumf %13, %14 : vector<128x128xf32>
    %16 = arith.truncf %15 : vector<128x128xf32> to vector<128x128xbf16>
    %c0_12 = arith.constant 0 : index
    %c0_13 = arith.constant 0 : index
    %17 = vector.load %arg6[%c0_12, %c0_13] : memref<128x128xbf16, #tpu.memory_space<vmem>>, vector<128x128xbf16>
    %cst_14 = arith.constant dense<0.000000e+00> : vector<128x128xf32>
    %18 = tpu.matmul %17, %16, %cst_14 {dimension_numbers = #tpu.dot_dimension_numbers<[1], [0], [0], [1], [0, 0, 1, 1], [], []>} : vector<128x128xbf16>, vector<128x128xbf16>, vector<128x128xf32> -> vector<128x128xf32>
    %c0_15 = arith.constant 0 : index
    %c0_16 = arith.constant 0 : index
    %19 = vector.load %arg7[%c0_15, %c0_16] : memref<128x1xf32, #tpu.memory_space<vmem>>, vector<128x1xf32>
    %20 = vector.broadcast %19 : vector<128x1xf32> to vector<128x128xf32>
    %21 = arith.addf %18, %20 : vector<128x128xf32>
    %cst_17 = arith.constant 0.000000e+00 : f32
    %22 = vector.broadcast %cst_17 : f32 to vector<128x128xf32>
    %23 = arith.maximumf %21, %22 : vector<128x128xf32>
    %24 = arith.truncf %23 : vector<128x128xf32> to vector<128x128xbf16>
    %c0_18 = arith.constant 0 : index
    %c0_19 = arith.constant 0 : index
    %25 = vector.load %arg8[%c0_18, %c0_19] : memref<128x1xf32, #tpu.memory_space<vmem>>, vector<128x1xf32>
    %26 = arith.extf %24 : vector<128x128xbf16> to vector<128x128xf32>
    %27 = vector.broadcast %25 : vector<128x1xf32> to vector<128x128xf32>
    %28 = arith.mulf %26, %27 : vector<128x128xf32>
    %cst_20 = arith.constant dense<0.000000e+00> : vector<128xf32>
    %29 = vector.multi_reduction <add>, %28, %cst_20 [0] : vector<128x128xf32> to vector<128xf32>
    %30 = vector.shape_cast %29 : vector<128xf32> to vector<1x128xf32>
    %c0_21 = arith.constant 0 : index
    %c0_22 = arith.constant 0 : index
    %31 = vector.load %arg9[%c0_21, %c0_22] : memref<1x1xf32, #tpu.memory_space<vmem>>, vector<1x1xf32>
    %32 = vector.broadcast %31 : vector<1x1xf32> to vector<1x128xf32>
    %33 = arith.addf %30, %32 : vector<1x128xf32>
    %34 = arith.negf %33 : vector<1x128xf32>
    %35 = math.exp %34 : vector<1x128xf32>
    %cst_23 = arith.constant 1.000000e+00 : f32
    %36 = vector.broadcast %cst_23 : f32 to vector<1x128xf32>
    %37 = arith.addf %36, %35 : vector<1x128xf32>
    %38 = arith.divf %36, %37 : vector<1x128xf32>
    %cst_24 = arith.constant 5.000000e-01 : f32
    %39 = vector.broadcast %cst_24 : f32 to vector<1x128xf32>
    %40 = arith.mulf %39, %38 : vector<1x128xf32>
    %c0_25 = arith.constant 0 : index
    %c0_26 = arith.constant 0 : index
    %41 = vector.load %arg10[%c0_25, %c0_26] : memref<1x128xf32, #tpu.memory_space<vmem>>, vector<1x128xf32>
    tpu.vector_store %arg10[%c0_25, %c0_26], %40 {strides = array<i32>} : memref<1x128xf32, #tpu.memory_space<vmem>>, vector<1x128xf32>,
    return
  }
  func.func @transform_0(%arg0: i32) -> (i32, i32) {
    %c0_i32 = arith.constant 0 : i32
    %c0_i32_0 = arith.constant 0 : i32
    return %c0_i32, %arg0 : i32, i32
  }
  func.func @transform_1(%arg0: i32) -> (i32, i32) {
    %c0_i32 = arith.constant 0 : i32
    %c0_i32_0 = arith.constant 0 : i32
    %c0_i32_1 = arith.constant 0 : i32
    return %c0_i32, %c0_i32_0 : i32, i32
  }
  func.func @transform_2(%arg0: i32) -> (i32, i32) {
    %c0_i32 = arith.constant 0 : i32
    %c0_i32_0 = arith.constant 0 : i32
    %c0_i32_1 = arith.constant 0 : i32
    return %c0_i32, %c0_i32_0 : i32, i32
  }
  func.func @transform_3(%arg0: i32) -> (i32, i32) {
    %c0_i32 = arith.constant 0 : i32
    %c0_i32_0 = arith.constant 0 : i32
    %c0_i32_1 = arith.constant 0 : i32
    return %c0_i32, %c0_i32_0 : i32, i32
  }
  func.func @transform_4(%arg0: i32) -> (i32, i32) {
    %c0_i32 = arith.constant 0 : i32
    %c0_i32_0 = arith.constant 0 : i32
    %c0_i32_1 = arith.constant 0 : i32
    return %c0_i32, %c0_i32_0 : i32, i32
  }
  func.func @transform_5(%arg0: i32) -> (i32, i32) {
    %c0_i32 = arith.constant 0 : i32
    %c0_i32_0 = arith.constant 0 : i32
    %c0_i32_1 = arith.constant 0 : i32
    return %c0_i32, %c0_i32_0 : i32, i32
  }
  func.func @transform_6(%arg0: i32) -> (i32, i32) {
    %c0_i32 = arith.constant 0 : i32
    %c0_i32_0 = arith.constant 0 : i32
    %c0_i32_1 = arith.constant 0 : i32
    return %c0_i32, %c0_i32_0 : i32, i32
  }
  func.func @transform_7(%arg0: i32) -> (i32, i32) {
    %c0_i32 = arith.constant 0 : i32
    %c0_i32_0 = arith.constant 0 : i32
    %c0_i32_1 = arith.constant 0 : i32
    return %c0_i32, %c0_i32_0 : i32, i32
  }
  func.func @transform_8(%arg0: i32) -> (i32, i32) {
    %c0_i32 = arith.constant 0 : i32
    %c0_i32_0 = arith.constant 0 : i32
    %c0_i32_1 = arith.constant 0 : i32
    return %c0_i32, %c0_i32_0 : i32, i32
  }
  func.func @transform_9(%arg0: i32) -> (i32, i32) {
    %c0_i32 = arith.constant 0 : i32
    %c0_i32_0 = arith.constant 0 : i32
    return %c0_i32, %arg0 : i32, i32
  }
}

</mosaic_0001>

<llo_original>
// kernel: heston_net_forward.1
$region0: #{heston_net_forward.1}
  #allocation0 [shape = 'u32[]', space=smem, size = 0x4, offset = 0x4, fixed_abs, tag = 'smem constant byte address 0x4 - core index']
  #allocation1 [shape = 'u32[144,128]{1,0:T(1,128)}', space=vmem, size = 0x12000, scoped, tag = 'internal scratch']
  #allocation2 [shape = 'f32[1,1]{1,0:T(1,128)S(1)}', space=vmem, size = 0x200, scoped, tag = 'scoped memory for heston_net_forward.1']
  %s0 = inlined_call_operand.vmem [shape: bf16[8,128], index: 0, kind: input, shape index: {}]
  %s1 = inlined_call_operand.vmem [shape: bf16[128,8], index: 1, kind: input, shape index: {}]
  %s2 = inlined_call_operand.vmem [shape: f32[128,1], index: 2, kind: input, shape index: {}]
  %s3 = inlined_call_operand.vmem [shape: bf16[128,128], index: 3, kind: input, shape index: {}]
  %s4 = inlined_call_operand.vmem [shape: f32[128,1], index: 4, kind: input, shape index: {}]
  %s5 = inlined_call_operand.vmem [shape: bf16[128,128], index: 5, kind: input, shape index: {}]
  %s6 = inlined_call_operand.vmem [shape: f32[128,1], index: 6, kind: input, shape index: {}]
  %s7 = inlined_call_operand.vmem [shape: f32[128,1], index: 7, kind: input, shape index: {}]
  %s8 = inlined_call_operand.<no memory space> [shape: f32[1,1], index: 8, kind: input, shape index: {}]
  %s9 = inlined_call_operand.vmem [shape: f32[1,128], index: 9, kind: output, shape index: {}]
  %s10 = sld [smem:[#allocation0]]
  $region46: #{heston_net_forward.1} parent=0
    _
  %s12 = ssub.s32 1, %s10
  %s13 = scalar_select 0, %s12, %s10
  %v14 = vstv %s8
  %15 = vst [vmem:[#allocation2] sm:$0x1] %v14
  // Predicated region
  $region2: #{heston_net_forward.1} parent=0 // pred_check
    _
  $region3: #{heston_net_forward.1} parent=0 // pred_check_branch
    %17 = sbr.rel (0) target = $region5
  $region4: #{heston_net_forward.1} parent=0 // pred_region
    _
  $region5: #{heston_net_forward.1} parent=0 // pred_fallthru
    _
  // Predicated region
  $region6: #{heston_net_forward.1} parent=0 // pred_check
    _
  $region7: #{heston_net_forward.1} parent=0 // pred_check_branch
    %19 = sbr.rel (0) target = $region9
  $region8: #{heston_net_forward.1} parent=0 // pred_region
    _
  $region9: #{heston_net_forward.1} parent=0 // pred_fallthru
    _
  // Predicated region
  $region10: #{heston_net_forward.1} parent=0 // pred_check
    _
  $region11: #{heston_net_forward.1} parent=0 // pred_check_branch
    %21 = sbr.rel (0) target = $region13
  $region12: #{heston_net_forward.1} parent=0 // pred_region
    _
  $region13: #{heston_net_forward.1} parent=0 // pred_fallthru
    _
  // Predicated region
  $region14: #{heston_net_forward.1} parent=0 // pred_check
    _
  $region15: #{heston_net_forward.1} parent=0 // pred_check_branch
    %23 = sbr.rel (0) target = $region17
  $region16: #{heston_net_forward.1} parent=0 // pred_region
    _
  $region17: #{heston_net_forward.1} parent=0 // pred_fallthru
    _
  // Predicated region
  $region18: #{heston_net_forward.1} parent=0 // pred_check
    _
  $region19: #{heston_net_forward.1} parent=0 // pred_check_branch
    %25 = sbr.rel (0) target = $region21
  $region20: #{heston_net_forward.1} parent=0 // pred_region
    _
  $region21: #{heston_net_forward.1} parent=0 // pred_fallthru
    _
  // Predicated region
  $region22: #{heston_net_forward.1} parent=0 // pred_check
    _
  $region23: #{heston_net_forward.1} parent=0 // pred_check_branch
    %27 = sbr.rel (0) target = $region25
  $region24: #{heston_net_forward.1} parent=0 // pred_region
    _
  $region25: #{heston_net_forward.1} parent=0 // pred_fallthru
    _
  // Predicated region
  $region26: #{heston_net_forward.1} parent=0 // pred_check
    _
  $region27: #{heston_net_forward.1} parent=0 // pred_check_branch
    %29 = sbr.rel (0) target = $region29
  $region28: #{heston_net_forward.1} parent=0 // pred_region
    _
  $region29: #{heston_net_forward.1} parent=0 // pred_fallthru
    _
  // Predicated region
  $region30: #{heston_net_forward.1} parent=0 // pred_check
    _
  $region31: #{heston_net_forward.1} parent=0 // pred_check_branch
    %31 = sbr.rel (0) target = $region33
  $region32: #{heston_net_forward.1} parent=0 // pred_region
    _
  $region33: #{heston_net_forward.1} parent=0 // pred_fallthru
    _
  // Predicated region
  $region34: #{heston_net_forward.1} parent=0 // pred_check
    _
  $region35: #{heston_net_forward.1} parent=0 // pred_check_branch
    %33 = sbr.rel (0) target = $region37
  $region36: #{heston_net_forward.1} parent=0 // pred_region
    _
  $region37: #{heston_net_forward.1} parent=0 // pred_fallthru
    _
  %v35 = vld [vmem:[%s0] sm:$0xf]
  %v36 = vld [vmem:[%s1] sm:$0xf]
  %v37 = vld [vmem:[%s1 + $0x4] sm:$0xf]
  %v38 = vld [vmem:[%s1 + $0x8] sm:$0xf]
  %v39 = vld [vmem:[%s1 + $0xc] sm:$0xf]
  %v40 = vld [vmem:[%s1 + $0x10] sm:$0xf]
  %v41 = vld [vmem:[%s1 + $0x14] sm:$0xf]
  %v42 = vld [vmem:[%s1 + $0x18] sm:$0xf]
  %v43 = vld [vmem:[%s1 + $0x1c] sm:$0xf]
  %v44 = vld [vmem:[%s1 + $0x20] sm:$0xf]
  %v45 = vld [vmem:[%s1 + $0x24] sm:$0xf]
  %v46 = vld [vmem:[%s1 + $0x28] sm:$0xf]
  %v47 = vld [vmem:[%s1 + $0x2c] sm:$0xf]
  %v48 = vld [vmem:[%s1 + $0x30] sm:$0xf]
  %v49 = vld [vmem:[%s1 + $0x34] sm:$0xf]
  %v50 = vld [vmem:[%s1 + $0x38] sm:$0xf]
  %v51 = vld [vmem:[%s1 + $0x3c] sm:$0xf]
  %v52 = vld [vmem:[%s2] sm:$0xff]
  %v53 = vld [vmem:[%s2 + $0x8] sm:$0xff]
  %v54 = vld [vmem:[%s2 + $0x10] sm:$0xff]
  %v55 = vld [vmem:[%s2 + $0x18] sm:$0xff]
  %v56 = vld [vmem:[%s2 + $0x20] sm:$0xff]
  %v57 = vld [vmem:[%s2 + $0x28] sm:$0xff]
  %v58 = vld [vmem:[%s2 + $0x30] sm:$0xff]
  %v59 = vld [vmem:[%s2 + $0x38] sm:$0xff]
  %v60 = vld [vmem:[%s2 + $0x40] sm:$0xff]
  %v61 = vld [vmem:[%s2 + $0x48] sm:$0xff]
  %v62 = vld [vmem:[%s2 + $0x50] sm:$0xff]
  %v63 = vld [vmem:[%s2 + $0x58] sm:$0xff]
  %v64 = vld [vmem:[%s2 + $0x60] sm:$0xff]
  %v65 = vld [vmem:[%s2 + $0x68] sm:$0xff]
  %v66 = vld [vmem:[%s2 + $0x70] sm:$0xff]
  %v67 = vld [vmem:[%s2 + $0x78] sm:$0xff]
  %69 = vset.pattern.permute.xlu0 0
  %70 = vperm.xlu0 %69, %v52
  %v71 = vpop.permute.xlu0 %70
  %74 = vset.pattern.permute.xlu0 0
  %75 = vperm.xlu0 %74, %v53
  %v76 = vpop.permute.xlu0 %75
  %79 = vset.pattern.permute.xlu0 0
  %80 = vperm.xlu0 %79, %v54
  %v81 = vpop.permute.xlu0 %80
  %84 = vset.pattern.permute.xlu0 0
  %85 = vperm.xlu0 %84, %v55
  %v86 = vpop.permute.xlu0 %85
  %89 = vset.pattern.permute.xlu0 0
  %90 = vperm.xlu0 %89, %v56
  %v91 = vpop.permute.xlu0 %90
  %94 = vset.pattern.permute.xlu0 0
  %95 = vperm.xlu0 %94, %v57
  %v96 = vpop.permute.xlu0 %95
  %99 = vset.pattern.permute.xlu0 0
  %100 = vperm.xlu0 %99, %v58
  %v101 = vpop.permute.xlu0 %100
  %104 = vset.pattern.permute.xlu0 0
  %105 = vperm.xlu0 %104, %v59
  %v106 = vpop.permute.xlu0 %105
  %109 = vset.pattern.permute.xlu0 0
  %110 = vperm.xlu0 %109, %v60
  %v111 = vpop.permute.xlu0 %110
  %114 = vset.pattern.permute.xlu0 0
  %115 = vperm.xlu0 %114, %v61
  %v116 = vpop.permute.xlu0 %115
  %119 = vset.pattern.permute.xlu0 0
  %120 = vperm.xlu0 %119, %v62
  %v121 = vpop.permute.xlu0 %120
  %124 = vset.pattern.permute.xlu0 0
  %125 = vperm.xlu0 %124, %v63
  %v126 = vpop.permute.xlu0 %125
  %129 = vset.pattern.permute.xlu0 0
  %130 = vperm.xlu0 %129, %v64
  %v131 = vpop.permute.xlu0 %130
  %134 = vset.pattern.permute.xlu0 0
  %135 = vperm.xlu0 %134, %v65
  %v136 = vpop.permute.xlu0 %135
  %139 = vset.pattern.permute.xlu0 0
  %140 = vperm.xlu0 %139, %v66
  %v141 = vpop.permute.xlu0 %140
  %144 = vset.pattern.permute.xlu0 0
  %145 = vperm.xlu0 %144, %v67
  %v146 = vpop.permute.xlu0 %145
  %v164 = vunpack.c.l.b16 %v36
  %v165 = vunpack.c.l.b16 %v37
  %v166 = vunpack.c.l.b16 %v38
  %v167 = vunpack.c.l.b16 %v39
  %v168 = vunpack.c.l.b16 %v40
  %v169 = vunpack.c.l.b16 %v41
  %v170 = vunpack.c.l.b16 %v42
  %v171 = vunpack.c.l.b16 %v43
  %v172 = vunpack.c.l.b16 %v44
  %v173 = vunpack.c.l.b16 %v45
  %v174 = vunpack.c.l.b16 %v46
  %v175 = vunpack.c.l.b16 %v47
  %v176 = vunpack.c.l.b16 %v48
  %v177 = vunpack.c.l.b16 %v49
  %v178 = vunpack.c.l.b16 %v50
  %v179 = vunpack.c.l.b16 %v51
  %v180 = vpack.c.b16 %v165, %v164
  %v181 = vpack.c.b16 %v167, %v166
  %v182 = vpack.c.b16 %v169, %v168
  %v183 = vpack.c.b16 %v171, %v170
  %v184 = vpack.c.b16 %v173, %v172
  %v185 = vpack.c.b16 %v175, %v174
  %v186 = vpack.c.b16 %v177, %v176
  %v187 = vpack.c.b16 %v179, %v178
  %vm188 = vcmask 64512
  %v190 = vsel %vm188, %v180, 0
  %v193 = vsel %vm188, %v181, 0
  %v196 = vsel %vm188, %v182, 0
  %v199 = vsel %vm188, %v183, 0
  %v202 = vsel %vm188, %v184, 0
  %v205 = vsel %vm188, %v185, 0
  %v208 = vsel %vm188, %v186, 0
  %v211 = vsel %vm188, %v187, 0
  %vm213 = vcmask 1043456
  %v215 = vsel %vm213, %v35, 0
  %217 = vmatprep.subr.bf16.mxu0 0
  %218 = vmatpush1.bf16.msra.mxu0 0
  %219 = vmatprep.subr.bf16.mxu0 0
  %220 = vmatpush1.bf16.msra.mxu0 0
  %221 = vmatprep.subr.bf16.mxu0 0
  %222 = vmatpush1.bf16.msra.mxu0 0
  %223 = vmatprep.subr.bf16.mxu0 0
  %224 = vmatpush1.bf16.msra.mxu0 0
  %225 = vmatprep.subr.bf16.mxu0 0
  %226 = vmatpush1.bf16.msra.mxu0 0
  %227 = vmatprep.subr.bf16.mxu0 0
  %228 = vmatpush1.bf16.msra.mxu0 0
  %229 = vmatprep.subr.bf16.mxu0 0
  %230 = vmatpush1.bf16.msra.mxu0 0
  %231 = vmatprep.subr.bf16.mxu0 0
  %232 = vmatpush1.bf16.msra.mxu0 %v215
  %233 = vmatprep.subr.bf16.mxu0 0
  %234 = vmatpush2.bf16.msra.mxu0 0
  %235 = vmatprep.subr.bf16.mxu0 0
  %236 = vmatpush2.bf16.msra.mxu0 0
  %237 = vmatprep.subr.bf16.mxu0 0
  %238 = vmatpush2.bf16.msra.mxu0 0
  %239 = vmatprep.subr.bf16.mxu0 0
  %240 = vmatpush2.bf16.msra.mxu0 0
  %241 = vmatprep.subr.bf16.mxu0 0
  %242 = vmatpush2.bf16.msra.mxu0 0
  %243 = vmatprep.subr.bf16.mxu0 0
  %244 = vmatpush2.bf16.msra.mxu0 0
  %245 = vmatprep.subr.bf16.mxu0 0
  %246 = vmatpush2.bf16.msra.mxu0 0
  %247 = vmatprep.subr.bf16.mxu0 0
  %248 = vmatpush2.bf16.msra.mxu0 0
  %249 = vmatprep.mubr.bf16.mxu0 0
  %250 = vmatmul.mubr.bf16.gmra.mxu0 %v190
  %v251 = vpop.f32.mrf.mxu0
  %v252 = vadd.f32 %v71, %v251
  %v253 = vpop.f32.mrf.mxu0
  %v254 = vpop.f32.mrf.mxu0
  %v255 = vadd.f32 %v76, %v254
  %v256 = vpop.f32.mrf.mxu0
  %257 = vmatprep.mubr.bf16.mxu0 0
  %258 = vmatmul.mubr.bf16.gmra.mxu0 %v193
  %v259 = vpop.f32.mrf.mxu0
  %v260 = vadd.f32 %v81, %v259
  %v261 = vpop.f32.mrf.mxu0
  %v262 = vpop.f32.mrf.mxu0
  %v263 = vadd.f32 %v86, %v262
  %v264 = vpop.f32.mrf.mxu0
  %265 = vmatprep.mubr.bf16.mxu0 0
  %266 = vmatmul.mubr.bf16.gmra.mxu0 %v196
  %v267 = vpop.f32.mrf.mxu0
  %v268 = vadd.f32 %v91, %v267
  %v269 = vpop.f32.mrf.mxu0
  %v270 = vpop.f32.mrf.mxu0
  %v271 = vadd.f32 %v96, %v270
  %v272 = vpop.f32.mrf.mxu0
  %273 = vmatprep.mubr.bf16.mxu0 0
  %274 = vmatmul.mubr.bf16.gmra.mxu0 %v199
  %v275 = vpop.f32.mrf.mxu0
  %v276 = vadd.f32 %v101, %v275
  %v277 = vpop.f32.mrf.mxu0
  %v278 = vpop.f32.mrf.mxu0
  %v279 = vadd.f32 %v106, %v278
  %v280 = vpop.f32.mrf.mxu0
  %281 = vmatprep.mubr.bf16.mxu0 0
  %282 = vmatmul.mubr.bf16.gmra.mxu0 %v202
  %v283 = vpop.f32.mrf.mxu0
  %v284 = vadd.f32 %v111, %v283
  %v285 = vpop.f32.mrf.mxu0
  %v286 = vpop.f32.mrf.mxu0
  %v287 = vadd.f32 %v116, %v286
  %v288 = vpop.f32.mrf.mxu0
  %289 = vmatprep.mubr.bf16.mxu0 0
  %290 = vmatmul.mubr.bf16.gmra.mxu0 %v205
  %v291 = vpop.f32.mrf.mxu0
  %v292 = vadd.f32 %v121, %v291
  %v293 = vpop.f32.mrf.mxu0
  %v294 = vpop.f32.mrf.mxu0
  %v295 = vadd.f32 %v126, %v294
  %v296 = vpop.f32.mrf.mxu0
  %297 = vmatprep.mubr.bf16.mxu0 0
  %298 = vmatmul.mubr.bf16.gmra.mxu0 %v208
  %v299 = vpop.f32.mrf.mxu0
  %v300 = vadd.f32 %v131, %v299
  %v301 = vpop.f32.mrf.mxu0
  %v302 = vpop.f32.mrf.mxu0
  %v303 = vadd.f32 %v136, %v302
  %v304 = vpop.f32.mrf.mxu0
  %305 = vmatprep.mubr.bf16.mxu0 0
  %306 = vmatmul.mubr.bf16.gmra.mxu0 %v211
  %v307 = vpop.f32.mrf.mxu0
  %v308 = vadd.f32 %v141, %v307
  %v309 = vpop.f32.mrf.mxu0
  %v310 = vpop.f32.mrf.mxu0
  %v311 = vadd.f32 %v146, %v310
  %v312 = vpop.f32.mrf.mxu0
  %313 = vdwg.mxu0
  %v314 = vmax.f32 %v252, 0.0
  %v315 = vmax.f32 %v255, 0.0
  %v316 = vmax.f32 %v260, 0.0
  %v317 = vmax.f32 %v263, 0.0
  %v318 = vmax.f32 %v268, 0.0
  %v319 = vmax.f32 %v271, 0.0
  %v320 = vmax.f32 %v276, 0.0
  %v321 = vmax.f32 %v279, 0.0
  %v322 = vmax.f32 %v284, 0.0
  %v323 = vmax.f32 %v287, 0.0
  %v324 = vmax.f32 %v292, 0.0
  %v325 = vmax.f32 %v295, 0.0
  %v326 = vmax.f32 %v300, 0.0
  %v327 = vmax.f32 %v303, 0.0
  %v328 = vmax.f32 %v308, 0.0
  %v329 = vmax.f32 %v311, 0.0
  %v330 = vpack.c.bf16 %v315, %v314
  %v331 = vpack.c.bf16 %v317, %v316
  %v332 = vpack.c.bf16 %v319, %v318
  %v333 = vpack.c.bf16 %v321, %v320
  %v334 = vpack.c.bf16 %v323, %v322
  %v335 = vpack.c.bf16 %v325, %v324
  %v336 = vpack.c.bf16 %v327, %v326
  %v337 = vpack.c.bf16 %v329, %v328
  %v338 = vld [vmem:[%s3] sm:$0xf]
  %v339 = vld [vmem:[%s3 + $0x4] sm:$0xf]
  %v340 = vld [vmem:[%s3 + $0x8] sm:$0xf]
  %v341 = vld [vmem:[%s3 + $0xc] sm:$0xf]
  %v342 = vld [vmem:[%s3 + $0x10] sm:$0xf]
  %v343 = vld [vmem:[%s3 + $0x14] sm:$0xf]
  %v344 = vld [vmem:[%s3 + $0x18] sm:$0xf]
  %v345 = vld [vmem:[%s3 + $0x1c] sm:$0xf]
  %v346 = vld [vmem:[%s3 + $0x20] sm:$0xf]
  %v347 = vld [vmem:[%s3 + $0x24] sm:$0xf]
  %v348 = vld [vmem:[%s3 + $0x28] sm:$0xf]
  %v349 = vld [vmem:[%s3 + $0x2c] sm:$0xf]
  %v350 = vld [vmem:[%s3 + $0x30] sm:$0xf]
  %v351 = vld [vmem:[%s3 + $0x34] sm:$0xf]
  %v352 = vld [vmem:[%s3 + $0x38] sm:$0xf]
  %v353 = vld [vmem:[%s3 + $0x3c] sm:$0xf]
  %v354 = vld [vmem:[%s4] sm:$0xff]
  %v355 = vld [vmem:[%s4 + $0x8] sm:$0xff]
  %v356 = vld [vmem:[%s4 + $0x10] sm:$0xff]
  %v357 = vld [vmem:[%s4 + $0x18] sm:$0xff]
  %v358 = vld [vmem:[%s4 + $0x20] sm:$0xff]
  %v359 = vld [vmem:[%s4 + $0x28] sm:$0xff]
  %v360 = vld [vmem:[%s4 + $0x30] sm:$0xff]
  %v361 = vld [vmem:[%s4 + $0x38] sm:$0xff]
  %v362 = vld [vmem:[%s4 + $0x40] sm:$0xff]
  %v363 = vld [vmem:[%s4 + $0x48] sm:$0xff]
  %v364 = vld [vmem:[%s4 + $0x50] sm:$0xff]
  %v365 = vld [vmem:[%s4 + $0x58] sm:$0xff]
  %v366 = vld [vmem:[%s4 + $0x60] sm:$0xff]
  %v367 = vld [vmem:[%s4 + $0x68] sm:$0xff]
  %v368 = vld [vmem:[%s4 + $0x70] sm:$0xff]
  %v369 = vld [vmem:[%s4 + $0x78] sm:$0xff]
  %371 = vset.pattern.permute.xlu0 0
  %372 = vperm.xlu0 %371, %v354
  %v373 = vpop.permute.xlu0 %372
  %376 = vset.pattern.permute.xlu0 0
  %377 = vperm.xlu0 %376, %v355
  %v378 = vpop.permute.xlu0 %377
  %381 = vset.pattern.permute.xlu0 0
  %382 = vperm.xlu0 %381, %v356
  %v383 = vpop.permute.xlu0 %382
  %386 = vset.pattern.permute.xlu0 0
  %387 = vperm.xlu0 %386, %v357
  %v388 = vpop.permute.xlu0 %387
  %391 = vset.pattern.permute.xlu0 0
  %392 = vperm.xlu0 %391, %v358
  %v393 = vpop.permute.xlu0 %392
  %396 = vset.pattern.permute.xlu0 0
  %397 = vperm.xlu0 %396, %v359
  %v398 = vpop.permute.xlu0 %397
  %401 = vset.pattern.permute.xlu0 0
  %402 = vperm.xlu0 %401, %v360
  %v403 = vpop.permute.xlu0 %402
  %406 = vset.pattern.permute.xlu0 0
  %407 = vperm.xlu0 %406, %v361
  %v408 = vpop.permute.xlu0 %407
  %411 = vset.pattern.permute.xlu0 0
  %412 = vperm.xlu0 %411, %v362
  %v413 = vpop.permute.xlu0 %412
  %416 = vset.pattern.permute.xlu0 0
  %417 = vperm.xlu0 %416, %v363
  %v418 = vpop.permute.xlu0 %417
  %421 = vset.pattern.permute.xlu0 0
  %422 = vperm.xlu0 %421, %v364
  %v423 = vpop.permute.xlu0 %422
  %426 = vset.pattern.permute.xlu0 0
  %427 = vperm.xlu0 %426, %v365
  %v428 = vpop.permute.xlu0 %427
  %431 = vset.pattern.permute.xlu0 0
  %432 = vperm.xlu0 %431, %v366
  %v433 = vpop.permute.xlu0 %432
  %436 = vset.pattern.permute.xlu0 0
  %437 = vperm.xlu0 %436, %v367
  %v438 = vpop.permute.xlu0 %437
  %441 = vset.pattern.permute.xlu0 0
  %442 = vperm.xlu0 %441, %v368
  %v443 = vpop.permute.xlu0 %442
  %446 = vset.pattern.permute.xlu0 0
  %447 = vperm.xlu0 %446, %v369
  %v448 = vpop.permute.xlu0 %447
  %v466 = vunpack.c.l.b16 %v338
  %v467 = vunpack.c.l.b16 %v339
  %v468 = vunpack.c.l.b16 %v340
  %v469 = vunpack.c.l.b16 %v341
  %v470 = vunpack.c.l.b16 %v342
  %v471 = vunpack.c.l.b16 %v343
  %v472 = vunpack.c.l.b16 %v344
  %v473 = vunpack.c.l.b16 %v345
  %v474 = vunpack.c.l.b16 %v346
  %v475 = vunpack.c.l.b16 %v347
  %v476 = vunpack.c.l.b16 %v348
  %v477 = vunpack.c.l.b16 %v349
  %v478 = vunpack.c.l.b16 %v350
  %v479 = vunpack.c.l.b16 %v351
  %v480 = vunpack.c.l.b16 %v352
  %v481 = vunpack.c.l.b16 %v353
  %v482 = vpack.c.b16 %v467, %v466
  %v483 = vpack.c.b16 %v469, %v468
  %v484 = vpack.c.b16 %v471, %v470
  %v485 = vpack.c.b16 %v473, %v472
  %v486 = vpack.c.b16 %v475, %v474
  %v487 = vpack.c.b16 %v477, %v476
  %v488 = vpack.c.b16 %v479, %v478
  %v489 = vpack.c.b16 %v481, %v480
  %498 = vmatprep.subr.bf16.mxu0 0
  %499 = vmatpush1.bf16.msra.mxu0 %v337
  %500 = vmatprep.subr.bf16.mxu0 0
  %501 = vmatpush1.bf16.msra.mxu0 %v336
  %502 = vmatprep.subr.bf16.mxu0 0
  %503 = vmatpush1.bf16.msra.mxu0 %v335
  %504 = vmatprep.subr.bf16.mxu0 0
  %505 = vmatpush1.bf16.msra.mxu0 %v334
  %506 = vmatprep.subr.bf16.mxu0 0
  %507 = vmatpush1.bf16.msra.mxu0 %v333
  %508 = vmatprep.subr.bf16.mxu0 0
  %509 = vmatpush1.bf16.msra.mxu0 %v332
  %510 = vmatprep.subr.bf16.mxu0 0
  %511 = vmatpush1.bf16.msra.mxu0 %v331
  %512 = vmatprep.subr.bf16.mxu0 0
  %513 = vmatpush1.bf16.msra.mxu0 %v330
  %514 = vmatprep.subr.bf16.mxu0 0
  %515 = vmatpush2.bf16.msra.mxu0 0
  %516 = vmatprep.subr.bf16.mxu0 0
  %517 = vmatpush2.bf16.msra.mxu0 0
  %518 = vmatprep.subr.bf16.mxu0 0
  %519 = vmatpush2.bf16.msra.mxu0 0
  %520 = vmatprep.subr.bf16.mxu0 0
  %521 = vmatpush2.bf16.msra.mxu0 0
  %522 = vmatprep.subr.bf16.mxu0 0
  %523 = vmatpush2.bf16.msra.mxu0 0
  %524 = vmatprep.subr.bf16.mxu0 0
  %525 = vmatpush2.bf16.msra.mxu0 0
  %526 = vmatprep.subr.bf16.mxu0 0
  %527 = vmatpush2.bf16.msra.mxu0 0
  %528 = vmatprep.subr.bf16.mxu0 0
  %529 = vmatpush2.bf16.msra.mxu0 0
  %530 = vmatprep.mubr.bf16.mxu0 0
  %531 = vmatmul.mubr.bf16.gmra.mxu0 %v482
  %v532 = vpop.f32.mrf.mxu0
  %v533 = vadd.f32 %v373, %v532
  %v534 = vpop.f32.mrf.mxu0
  %v535 = vpop.f32.mrf.mxu0
  %v536 = vadd.f32 %v378, %v535
  %v537 = vpop.f32.mrf.mxu0
  %538 = vmatprep.mubr.bf16.mxu0 0
  %539 = vmatmul.mubr.bf16.gmra.mxu0 %v483
  %v540 = vpop.f32.mrf.mxu0
  %v541 = vadd.f32 %v383, %v540
  %v542 = vpop.f32.mrf.mxu0
  %v543 = vpop.f32.mrf.mxu0
  %v544 = vadd.f32 %v388, %v543
  %v545 = vpop.f32.mrf.mxu0
  %546 = vmatprep.mubr.bf16.mxu0 0
  %547 = vmatmul.mubr.bf16.gmra.mxu0 %v484
  %v548 = vpop.f32.mrf.mxu0
  %v549 = vadd.f32 %v393, %v548
  %v550 = vpop.f32.mrf.mxu0
  %v551 = vpop.f32.mrf.mxu0
  %v552 = vadd.f32 %v398, %v551
  %v553 = vpop.f32.mrf.mxu0
  %554 = vmatprep.mubr.bf16.mxu0 0
  %555 = vmatmul.mubr.bf16.gmra.mxu0 %v485
  %v556 = vpop.f32.mrf.mxu0
  %v557 = vadd.f32 %v403, %v556
  %v558 = vpop.f32.mrf.mxu0
  %v559 = vpop.f32.mrf.mxu0
  %v560 = vadd.f32 %v408, %v559
  %v561 = vpop.f32.mrf.mxu0
  %562 = vmatprep.mubr.bf16.mxu0 0
  %563 = vmatmul.mubr.bf16.gmra.mxu0 %v486
  %v564 = vpop.f32.mrf.mxu0
  %v565 = vadd.f32 %v413, %v564
  %v566 = vpop.f32.mrf.mxu0
  %v567 = vpop.f32.mrf.mxu0
  %v568 = vadd.f32 %v418, %v567
  %v569 = vpop.f32.mrf.mxu0
  %570 = vmatprep.mubr.bf16.mxu0 0
  %571 = vmatmul.mubr.bf16.gmra.mxu0 %v487
  %v572 = vpop.f32.mrf.mxu0
  %v573 = vadd.f32 %v423, %v572
  %v574 = vpop.f32.mrf.mxu0
  %v575 = vpop.f32.mrf.mxu0
  %v576 = vadd.f32 %v428, %v575
  %v577 = vpop.f32.mrf.mxu0
  %578 = vmatprep.mubr.bf16.mxu0 0
  %579 = vmatmul.mubr.bf16.gmra.mxu0 %v488
  %v580 = vpop.f32.mrf.mxu0
  %v581 = vadd.f32 %v433, %v580
  %v582 = vpop.f32.mrf.mxu0
  %v583 = vpop.f32.mrf.mxu0
  %v584 = vadd.f32 %v438, %v583
  %v585 = vpop.f32.mrf.mxu0
  %586 = vmatprep.mubr.bf16.mxu0 0
  %587 = vmatmul.mubr.bf16.gmra.mxu0 %v489
  %v588 = vpop.f32.mrf.mxu0
  %v589 = vadd.f32 %v443, %v588
  %v590 = vpop.f32.mrf.mxu0
  %v591 = vpop.f32.mrf.mxu0
  %v592 = vadd.f32 %v448, %v591
  %v593 = vpop.f32.mrf.mxu0
  %594 = vdwg.mxu0
  %v595 = vmax.f32 %v533, 0.0
  %v596 = vmax.f32 %v536, 0.0
  %v597 = vmax.f32 %v541, 0.0
  %v598 = vmax.f32 %v544, 0.0
  %v599 = vmax.f32 %v549, 0.0
  %v600 = vmax.f32 %v552, 0.0
  %v601 = vmax.f32 %v557, 0.0
  %v602 = vmax.f32 %v560, 0.0
  %v603 = vmax.f32 %v565, 0.0
  %v604 = vmax.f32 %v568, 0.0
  %v605 = vmax.f32 %v573, 0.0
  %v606 = vmax.f32 %v576, 0.0
  %v607 = vmax.f32 %v581, 0.0
  %v608 = vmax.f32 %v584, 0.0
  %v609 = vmax.f32 %v589, 0.0
  %v610 = vmax.f32 %v592, 0.0
  %v611 = vpack.c.bf16 %v596, %v595
  %v612 = vpack.c.bf16 %v598, %v597
  %v613 = vpack.c.bf16 %v600, %v599
  %v614 = vpack.c.bf16 %v602, %v601
  %v615 = vpack.c.bf16 %v604, %v603
  %v616 = vpack.c.bf16 %v606, %v605
  %v617 = vpack.c.bf16 %v608, %v607
  %v618 = vpack.c.bf16 %v610, %v609
  %v619 = vld [vmem:[%s5] sm:$0xf]
  %v620 = vld [vmem:[%s5 + $0x4] sm:$0xf]
  %v621 = vld [vmem:[%s5 + $0x8] sm:$0xf]
  %v622 = vld [vmem:[%s5 + $0xc] sm:$0xf]
  %v623 = vld [vmem:[%s5 + $0x10] sm:$0xf]
  %v624 = vld [vmem:[%s5 + $0x14] sm:$0xf]
  %v625 = vld [vmem:[%s5 + $0x18] sm:$0xf]
  %v626 = vld [vmem:[%s5 + $0x1c] sm:$0xf]
  %v627 = vld [vmem:[%s5 + $0x20] sm:$0xf]
  %v628 = vld [vmem:[%s5 + $0x24] sm:$0xf]
  %v629 = vld [vmem:[%s5 + $0x28] sm:$0xf]
  %v630 = vld [vmem:[%s5 + $0x2c] sm:$0xf]
  %v631 = vld [vmem:[%s5 + $0x30] sm:$0xf]
  %v632 = vld [vmem:[%s5 + $0x34] sm:$0xf]
  %v633 = vld [vmem:[%s5 + $0x38] sm:$0xf]
  %v634 = vld [vmem:[%s5 + $0x3c] sm:$0xf]
  %v635 = vld [vmem:[%s6] sm:$0xff]
  %v636 = vld [vmem:[%s6 + $0x8] sm:$0xff]
  %v637 = vld [vmem:[%s6 + $0x10] sm:$0xff]
  %v638 = vld [vmem:[%s6 + $0x18] sm:$0xff]
  %v639 = vld [vmem:[%s6 + $0x20] sm:$0xff]
  %v640 = vld [vmem:[%s6 + $0x28] sm:$0xff]
  %v641 = vld [vmem:[%s6 + $0x30] sm:$0xff]
  %v642 = vld [vmem:[%s6 + $0x38] sm:$0xff]
  %v643 = vld [vmem:[%s6 + $0x40] sm:$0xff]
  %v644 = vld [vmem:[%s6 + $0x48] sm:$0xff]
  %v645 = vld [vmem:[%s6 + $0x50] sm:$0xff]
  %v646 = vld [vmem:[%s6 + $0x58] sm:$0xff]
  %v647 = vld [vmem:[%s6 + $0x60] sm:$0xff]
  %v648 = vld [vmem:[%s6 + $0x68] sm:$0xff]
  %v649 = vld [vmem:[%s6 + $0x70] sm:$0xff]
  %v650 = vld [vmem:[%s6 + $0x78] sm:$0xff]
  %652 = vset.pattern.permute.xlu0 0
  %653 = vperm.xlu0 %652, %v635
  %v654 = vpop.permute.xlu0 %653
  %657 = vset.pattern.permute.xlu0 0
  %658 = vperm.xlu0 %657, %v636
  %v659 = vpop.permute.xlu0 %658
  %662 = vset.pattern.permute.xlu0 0
  %663 = vperm.xlu0 %662, %v637
  %v664 = vpop.permute.xlu0 %663
  %667 = vset.pattern.permute.xlu0 0
  %668 = vperm.xlu0 %667, %v638
  %v669 = vpop.permute.xlu0 %668
  %672 = vset.pattern.permute.xlu0 0
  %673 = vperm.xlu0 %672, %v639
  %v674 = vpop.permute.xlu0 %673
  %677 = vset.pattern.permute.xlu0 0
  %678 = vperm.xlu0 %677, %v640
  %v679 = vpop.permute.xlu0 %678
  %682 = vset.pattern.permute.xlu0 0
  %683 = vperm.xlu0 %682, %v641
  %v684 = vpop.permute.xlu0 %683
  %687 = vset.pattern.permute.xlu0 0
  %688 = vperm.xlu0 %687, %v642
  %v689 = vpop.permute.xlu0 %688
  %692 = vset.pattern.permute.xlu0 0
  %693 = vperm.xlu0 %692, %v643
  %v694 = vpop.permute.xlu0 %693
  %697 = vset.pattern.permute.xlu0 0
  %698 = vperm.xlu0 %697, %v644
  %v699 = vpop.permute.xlu0 %698
  %702 = vset.pattern.permute.xlu0 0
  %703 = vperm.xlu0 %702, %v645
  %v704 = vpop.permute.xlu0 %703
  %707 = vset.pattern.permute.xlu0 0
  %708 = vperm.xlu0 %707, %v646
  %v709 = vpop.permute.xlu0 %708
  %712 = vset.pattern.permute.xlu0 0
  %713 = vperm.xlu0 %712, %v647
  %v714 = vpop.permute.xlu0 %713
  %717 = vset.pattern.permute.xlu0 0
  %718 = vperm.xlu0 %717, %v648
  %v719 = vpop.permute.xlu0 %718
  %722 = vset.pattern.permute.xlu0 0
  %723 = vperm.xlu0 %722, %v649
  %v724 = vpop.permute.xlu0 %723
  %727 = vset.pattern.permute.xlu0 0
  %728 = vperm.xlu0 %727, %v650
  %v729 = vpop.permute.xlu0 %728
  %v747 = vunpack.c.l.b16 %v619
  %v748 = vunpack.c.l.b16 %v620
  %v749 = vunpack.c.l.b16 %v621
  %v750 = vunpack.c.l.b16 %v622
  %v751 = vunpack.c.l.b16 %v623
  %v752 = vunpack.c.l.b16 %v624
  %v753 = vunpack.c.l.b16 %v625
  %v754 = vunpack.c.l.b16 %v626
  %v755 = vunpack.c.l.b16 %v627
  %v756 = vunpack.c.l.b16 %v628
  %v757 = vunpack.c.l.b16 %v629
  %v758 = vunpack.c.l.b16 %v630
  %v759 = vunpack.c.l.b16 %v631
  %v760 = vunpack.c.l.b16 %v632
  %v761 = vunpack.c.l.b16 %v633
  %v762 = vunpack.c.l.b16 %v634
  %v763 = vpack.c.b16 %v748, %v747
  %v764 = vpack.c.b16 %v750, %v749
  %v765 = vpack.c.b16 %v752, %v751
  %v766 = vpack.c.b16 %v754, %v753
  %v767 = vpack.c.b16 %v756, %v755
  %v768 = vpack.c.b16 %v758, %v757
  %v769 = vpack.c.b16 %v760, %v759
  %v770 = vpack.c.b16 %v762, %v761
  %779 = vmatprep.subr.bf16.mxu0 0
  %780 = vmatpush1.bf16.msra.mxu0 %v618
  %781 = vmatprep.subr.bf16.mxu0 0
  %782 = vmatpush1.bf16.msra.mxu0 %v617
  %783 = vmatprep.subr.bf16.mxu0 0
  %784 = vmatpush1.bf16.msra.mxu0 %v616
  %785 = vmatprep.subr.bf16.mxu0 0
  %786 = vmatpush1.bf16.msra.mxu0 %v615
  %787 = vmatprep.subr.bf16.mxu0 0
  %788 = vmatpush1.bf16.msra.mxu0 %v614
  %789 = vmatprep.subr.bf16.mxu0 0
  %790 = vmatpush1.bf16.msra.mxu0 %v613
  %791 = vmatprep.subr.bf16.mxu0 0
  %792 = vmatpush1.bf16.msra.mxu0 %v612
  %793 = vmatprep.subr.bf16.mxu0 0
  %794 = vmatpush1.bf16.msra.mxu0 %v611
  %795 = vmatprep.subr.bf16.mxu0 0
  %796 = vmatpush2.bf16.msra.mxu0 0
  %797 = vmatprep.subr.bf16.mxu0 0
  %798 = vmatpush2.bf16.msra.mxu0 0
  %799 = vmatprep.subr.bf16.mxu0 0
  %800 = vmatpush2.bf16.msra.mxu0 0
  %801 = vmatprep.subr.bf16.mxu0 0
  %802 = vmatpush2.bf16.msra.mxu0 0
  %803 = vmatprep.subr.bf16.mxu0 0
  %804 = vmatpush2.bf16.msra.mxu0 0
  %805 = vmatprep.subr.bf16.mxu0 0
  %806 = vmatpush2.bf16.msra.mxu0 0
  %807 = vmatprep.subr.bf16.mxu0 0
  %808 = vmatpush2.bf16.msra.mxu0 0
  %809 = vmatprep.subr.bf16.mxu0 0
  %810 = vmatpush2.bf16.msra.mxu0 0
  %811 = vmatprep.mubr.bf16.mxu0 0
  %812 = vmatmul.mubr.bf16.gmra.mxu0 %v763
  %v813 = vpop.f32.mrf.mxu0
  %v814 = vadd.f32 %v654, %v813
  %v815 = vpop.f32.mrf.mxu0
  %v816 = vpop.f32.mrf.mxu0
  %v817 = vadd.f32 %v659, %v816
  %v818 = vpop.f32.mrf.mxu0
  %819 = vmatprep.mubr.bf16.mxu0 0
  %820 = vmatmul.mubr.bf16.gmra.mxu0 %v764
  %v821 = vpop.f32.mrf.mxu0
  %v822 = vadd.f32 %v664, %v821
  %v823 = vpop.f32.mrf.mxu0
  %v824 = vpop.f32.mrf.mxu0
  %v825 = vadd.f32 %v669, %v824
  %v826 = vpop.f32.mrf.mxu0
  %827 = vmatprep.mubr.bf16.mxu0 0
  %828 = vmatmul.mubr.bf16.gmra.mxu0 %v765
  %v829 = vpop.f32.mrf.mxu0
  %v830 = vadd.f32 %v674, %v829
  %v831 = vpop.f32.mrf.mxu0
  %v832 = vpop.f32.mrf.mxu0
  %v833 = vadd.f32 %v679, %v832
  %v834 = vpop.f32.mrf.mxu0
  %835 = vmatprep.mubr.bf16.mxu0 0
  %836 = vmatmul.mubr.bf16.gmra.mxu0 %v766
  %v837 = vpop.f32.mrf.mxu0
  %v838 = vadd.f32 %v684, %v837
  %v839 = vpop.f32.mrf.mxu0
  %v840 = vpop.f32.mrf.mxu0
  %v841 = vadd.f32 %v689, %v840
  %v842 = vpop.f32.mrf.mxu0
  %843 = vmatprep.mubr.bf16.mxu0 0
  %844 = vmatmul.mubr.bf16.gmra.mxu0 %v767
  %v845 = vpop.f32.mrf.mxu0
  %v846 = vadd.f32 %v694, %v845
  %v847 = vpop.f32.mrf.mxu0
  %v848 = vpop.f32.mrf.mxu0
  %v849 = vadd.f32 %v699, %v848
  %v850 = vpop.f32.mrf.mxu0
  %851 = vmatprep.mubr.bf16.mxu0 0
  %852 = vmatmul.mubr.bf16.gmra.mxu0 %v768
  %v853 = vpop.f32.mrf.mxu0
  %v854 = vadd.f32 %v704, %v853
  %v855 = vpop.f32.mrf.mxu0
  %v856 = vpop.f32.mrf.mxu0
  %v857 = vadd.f32 %v709, %v856
  %v858 = vpop.f32.mrf.mxu0
  %859 = vmatprep.mubr.bf16.mxu0 0
  %860 = vmatmul.mubr.bf16.gmra.mxu0 %v769
  %v861 = vpop.f32.mrf.mxu0
  %v862 = vadd.f32 %v714, %v861
  %v863 = vpop.f32.mrf.mxu0
  %v864 = vpop.f32.mrf.mxu0
  %v865 = vadd.f32 %v719, %v864
  %v866 = vpop.f32.mrf.mxu0
  %867 = vmatprep.mubr.bf16.mxu0 0
  %868 = vmatmul.mubr.bf16.gmra.mxu0 %v770
  %v869 = vpop.f32.mrf.mxu0
  %v870 = vadd.f32 %v724, %v869
  %v871 = vpop.f32.mrf.mxu0
  %v872 = vpop.f32.mrf.mxu0
  %v873 = vadd.f32 %v729, %v872
  %v874 = vpop.f32.mrf.mxu0
  %875 = vdwg.mxu0
  %v876 = vmax.f32 %v814, 0.0
  %v877 = vmax.f32 %v817, 0.0
  %v878 = vmax.f32 %v822, 0.0
  %v879 = vmax.f32 %v825, 0.0
  %v880 = vmax.f32 %v830, 0.0
  %v881 = vmax.f32 %v833, 0.0
  %v882 = vmax.f32 %v838, 0.0
  %v883 = vmax.f32 %v841, 0.0
  %v884 = vmax.f32 %v846, 0.0
  %v885 = vmax.f32 %v849, 0.0
  %v886 = vmax.f32 %v854, 0.0
  %v887 = vmax.f32 %v857, 0.0
  %v888 = vmax.f32 %v862, 0.0
  %v889 = vmax.f32 %v865, 0.0
  %v890 = vmax.f32 %v870, 0.0
  %v891 = vmax.f32 %v873, 0.0
  %v892 = vpack.c.bf16 %v877, %v876
  %v893 = vpack.c.bf16 %v879, %v878
  %v894 = vpack.c.bf16 %v881, %v880
  %v895 = vpack.c.bf16 %v883, %v882
  %v896 = vpack.c.bf16 %v885, %v884
  %v897 = vpack.c.bf16 %v887, %v886
  %v898 = vpack.c.bf16 %v889, %v888
  %v899 = vpack.c.bf16 %v891, %v890
  %v900 = vld [vmem:[%s7] sm:$0xff]
  %v901 = vld [vmem:[%s7 + $0x8] sm:$0xff]
  %v902 = vld [vmem:[%s7 + $0x10] sm:$0xff]
  %v903 = vld [vmem:[%s7 + $0x18] sm:$0xff]
  %v904 = vld [vmem:[%s7 + $0x20] sm:$0xff]
  %v905 = vld [vmem:[%s7 + $0x28] sm:$0xff]
  %v906 = vld [vmem:[%s7 + $0x30] sm:$0xff]
  %v907 = vld [vmem:[%s7 + $0x38] sm:$0xff]
  %v908 = vld [vmem:[%s7 + $0x40] sm:$0xff]
  %v909 = vld [vmem:[%s7 + $0x48] sm:$0xff]
  %v910 = vld [vmem:[%s7 + $0x50] sm:$0xff]
  %v911 = vld [vmem:[%s7 + $0x58] sm:$0xff]
  %v912 = vld [vmem:[%s7 + $0x60] sm:$0xff]
  %v913 = vld [vmem:[%s7 + $0x68] sm:$0xff]
  %v914 = vld [vmem:[%s7 + $0x70] sm:$0xff]
  %v915 = vld [vmem:[%s7 + $0x78] sm:$0xff]
  %v916 = vunpack.c.l.bf16 %v892
  %v917 = vunpack.c.h.bf16 %v892
  %v918 = vunpack.c.l.bf16 %v893
  %v919 = vunpack.c.h.bf16 %v893
  %v920 = vunpack.c.l.bf16 %v894
  %v921 = vunpack.c.h.bf16 %v894
  %v922 = vunpack.c.l.bf16 %v895
  %v923 = vunpack.c.h.bf16 %v895
  %v924 = vunpack.c.l.bf16 %v896
  %v925 = vunpack.c.h.bf16 %v896
  %v926 = vunpack.c.l.bf16 %v897
  %v927 = vunpack.c.h.bf16 %v897
  %v928 = vunpack.c.l.bf16 %v898
  %v929 = vunpack.c.h.bf16 %v898
  %v930 = vunpack.c.l.bf16 %v899
  %v931 = vunpack.c.h.bf16 %v899
  %933 = vset.pattern.permute.xlu0 0
  %934 = vperm.xlu0 %933, %v900
  %v935 = vpop.permute.xlu0 %934
  %938 = vset.pattern.permute.xlu0 0
  %939 = vperm.xlu0 %938, %v901
  %v940 = vpop.permute.xlu0 %939
  %943 = vset.pattern.permute.xlu0 0
  %944 = vperm.xlu0 %943, %v902
  %v945 = vpop.permute.xlu0 %944
  %948 = vset.pattern.permute.xlu0 0
  %949 = vperm.xlu0 %948, %v903
  %v950 = vpop.permute.xlu0 %949
  %953 = vset.pattern.permute.xlu0 0
  %954 = vperm.xlu0 %953, %v904
  %v955 = vpop.permute.xlu0 %954
  %958 = vset.pattern.permute.xlu0 0
  %959 = vperm.xlu0 %958, %v905
  %v960 = vpop.permute.xlu0 %959
  %963 = vset.pattern.permute.xlu0 0
  %964 = vperm.xlu0 %963, %v906
  %v965 = vpop.permute.xlu0 %964
  %968 = vset.pattern.permute.xlu0 0
  %969 = vperm.xlu0 %968, %v907
  %v970 = vpop.permute.xlu0 %969
  %973 = vset.pattern.permute.xlu0 0
  %974 = vperm.xlu0 %973, %v908
  %v975 = vpop.permute.xlu0 %974
  %978 = vset.pattern.permute.xlu0 0
  %979 = vperm.xlu0 %978, %v909
  %v980 = vpop.permute.xlu0 %979
  %983 = vset.pattern.permute.xlu0 0
  %984 = vperm.xlu0 %983, %v910
  %v985 = vpop.permute.xlu0 %984
  %988 = vset.pattern.permute.xlu0 0
  %989 = vperm.xlu0 %988, %v911
  %v990 = vpop.permute.xlu0 %989
  %993 = vset.pattern.permute.xlu0 0
  %994 = vperm.xlu0 %993, %v912
  %v995 = vpop.permute.xlu0 %994
  %998 = vset.pattern.permute.xlu0 0
  %999 = vperm.xlu0 %998, %v913
  %v1000 = vpop.permute.xlu0 %999
  %1003 = vset.pattern.permute.xlu0 0
  %1004 = vperm.xlu0 %1003, %v914
  %v1005 = vpop.permute.xlu0 %1004
  %1008 = vset.pattern.permute.xlu0 0
  %1009 = vperm.xlu0 %1008, %v915
  %v1010 = vpop.permute.xlu0 %1009
  %v1012 = vmul.f32 %v916, %v935
  %v1013 = vmul.f32 %v917, %v940
  %v1014 = vmul.f32 %v918, %v945
  %v1015 = vmul.f32 %v919, %v950
  %v1016 = vmul.f32 %v920, %v955
  %v1017 = vmul.f32 %v921, %v960
  %v1018 = vmul.f32 %v922, %v965
  %v1019 = vmul.f32 %v923, %v970
  %v1020 = vmul.f32 %v924, %v975
  %v1021 = vmul.f32 %v925, %v980
  %v1022 = vmul.f32 %v926, %v985
  %v1023 = vmul.f32 %v927, %v990
  %v1024 = vmul.f32 %v928, %v995
  %v1025 = vmul.f32 %v929, %v1000
  %v1026 = vmul.f32 %v930, %v1005
  %v1027 = vmul.f32 %v931, %v1010
  %v1028 = vadd.f32 %v1012, %v1013
  %v1029 = vadd.f32 %v1028, %v1014
  %v1030 = vadd.f32 %v1029, %v1015
  %v1031 = vadd.f32 %v1030, %v1016
  %v1032 = vadd.f32 %v1031, %v1017
  %v1033 = vadd.f32 %v1032, %v1018
  %v1034 = vadd.f32 %v1033, %v1019
  %v1035 = vadd.f32 %v1034, %v1020
  %v1036 = vadd.f32 %v1035, %v1021
  %v1037 = vadd.f32 %v1036, %v1022
  %v1038 = vadd.f32 %v1037, %v1023
  %v1039 = vadd.f32 %v1038, %v1024
  %v1040 = vadd.f32 %v1039, %v1025
  %v1041 = vadd.f32 %v1040, %v1026
  %v1042 = vadd.f32 %v1041, %v1027
  %v1043 = vrot.slane %v1042, 4
  %v1044 = vadd.f32 %v1042, %v1043
  %v1045 = vrot.slane %v1044, 2
  %v1046 = vadd.f32 %v1044, %v1045
  %v1047 = vrot.slane %v1046, 1
  %v1048 = vadd.f32 %v1046, %v1047
  %v1049 = vld [vmem:[#allocation2] sm:$0x1]
  %1051 = vset.pattern.permute.xlu0 0
  %1052 = vperm.xlu0 %1051, %v1049
  %v1053 = vpop.permute.xlu0 %1052
  %v1055 = vlaneseq
  %v1056 = vshrl.u32 %v1055, 7
  %v1057 = vsub.s32 0, %v1056
  %v1058 = vrot.slane %v1053, %v1057
  %v1059 = vadd.f32 %v1048, %v1058
  %v1060 = vxor.u32 %v1059, 2147483648
  %v1061 = vmul.f32 %v1060, 1.442695
  %v1062 = vpow.pop %v1061
  %v1063 = vadd.f32 %v1062, 1.0
  %v1064 = vrcp.pop %v1063
  %v1065 = vmul.f32 1.0, %v1064
  %v1066 = vmul.f32 %v1065, 0.5
  %1067 = vst [vmem:[%s9] sm:$0x1] %v1066
  // Predicated region
  $region38: #{heston_net_forward.1} parent=0 // pred_check
    _
  $region39: #{heston_net_forward.1} parent=0 // pred_check_branch
    %1069 = sbr.rel (0) target = $region41
  $region40: #{heston_net_forward.1} parent=0 // pred_region
    _
  $region41: #{heston_net_forward.1} parent=0 // pred_fallthru
    _
  // Predicated region
  $region42: #{heston_net_forward.1} parent=0 // pred_check
    _
  $region43: #{heston_net_forward.1} parent=0 // pred_check_branch
    %1071 = sbr.rel (0) target = $region45
  $region44: #{heston_net_forward.1} parent=0 // pred_region
    _
  $region45: #{heston_net_forward.1} parent=0 // pred_fallthru
    _

</llo_original>
